<compile_context>
chip_gen: v7x
topology: tpu7x:2x2x1
jax: 0.10.0
libtpu: 0.0.40
codegen_flags: <defaults>
</compile_context>

<pallas_src>
import functools
import math

import numpy as np
import jax
import jax.numpy as jnp
from jax.experimental import pallas as pl
from jax.experimental.pallas import tpu as pltpu

LANES = 128


def _r16(x):
    return (x + 15) // 16 * 16


# ----------------------------------------------------------------------------
# Static layout of the packed slabs (shared by host packer and kernel)
# ----------------------------------------------------------------------------
class _Layout:
    def __init__(self, hidden_dim, memory_size, vocab):
        H = hidden_dim
        H2 = H // 2
        M = memory_size
        V = vocab
        G = 4 * M
        assert H % 2 == 0
        self.H, self.H2, self.M, self.V, self.G = H, H2, M, V, G

        # per-step encoder input lanes: [obs(2) | msg(V) | zero-pad]
        self.x_in = 2 + V
        self.x_pad = _r16(self.x_in)

        # VMEM-resident recurrent state lanes: [hA | hM | cA | cM]
        self.s_width = 4 * M

        # stage-1 (input encoders) result columns
        self.c_oA, self.c_oM = 0, H2
        self.c_m1A, self.c_m1M = 2 * H2, 3 * H2
        self.n1 = 4 * H2

        # fused h-projections of both LSTM cells
        self.c_ghA, self.c_ghM = 0, G
        self.nh = 2 * G

        # stage-2 result columns
        self.c_repA, self.c_repM = 0, H
        self.c_m2A, self.c_m2M = 2 * H, 2 * H + H2
        self.n2 = 2 * H + 2 * H2

        # stage-3 (rep1) columns [zA | z1M]
        self.n3 = 2 * H

        # stage-4 columns [actor gates_x | critic rep2]
        self.c_gxA, self.c_z2 = 0, G
        self.n4 = G + H

        # fused heads columns [message logits | action logit | value]
        self.c_msg, self.c_act, self.c_val = 0, V, V + 1
        self.n5 = V + 2

        # ---- weight slab row offsets (16-aligned for bf16 sublane tiles) ----
        off = 0

        def take(rows):
            nonlocal off
            o = off
            off += _r16(rows)
            return o

        self.w1 = take(self.x_pad)     # [obs|msg]      -> [oA|oM|m1A|m1M]
        self.whh = take(2 * M)         # [hA|hM]        -> [gates_hA|gates_hM]
        self.w2 = take(4 * H2)         # enc            -> [repA|repM|m2A|m2M]
        self.w3 = take(2 * H2)         # [m2A|m2M]      -> rep1 msg contribution
        self.w4 = take(2 * H)          # rep1           -> [gates_xA | rep2]
        self.wr3 = take(H)             # critic rep3
        self.wr4 = take(H)             # critic rep4
        self.wih = take(H)             # critic LSTM x-projection
        self.whd = take(2 * M)         # [hA|hM]        -> [message|action|value]
        self.w_rows = off

        # ---- bias slab rows (f32; kept separate so the weights can be bf16) ----
        self.b1, self.bhh, self.b2, self.b4 = 0, 1, 2, 3
        self.br3, self.br4, self.bhd = 4, 5, 6
        self.b_rows = 8

        # ---- packed per-step output lanes ----
        self.o_action = 0
        self.o_value = 1
        self.o_memA = 2
        self.o_memM = 2 + 2 * M
        self.o_msg = 2 + 4 * M
        self.o_width = 2 + 4 * M + V

        for w in (self.x_pad, self.s_width, self.n1, self.nh, self.n2,
                  self.n3, self.n4, self.n5, self.o_width):
            assert w <= LANES, w


# ----------------------------------------------------------------------------
# Pallas kernel: one recurrent timestep per grid iteration; weights resident,
# recurrent state carried in VMEM scratch, one lane-dense store per step.
# ----------------------------------------------------------------------------
def aria_seq_kernel(x_ref, init_ref, w_ref, b_ref, out_ref, state_ref, *,
                    hidden_dim, memory_size, vocab):
    L = _Layout(hidden_dim, memory_size, vocab)
    H, H2, M, V, G = L.H, L.H2, L.M, L.V, L.G
    B = state_ref.shape[0]
    f32 = jnp.float32
    bf16 = jnp.bfloat16
    sig = jax.nn.sigmoid
    relu = lambda v: jnp.maximum(v, 0.0)

    t = pl.program_id(1)

    @pl.when(t == 0)
    def _():
        state_ref[...] = init_ref[...]        # [hA | hM | cA | cM] from caller

    def mm(lhs, woff, brow=None):
        rows = lhs.shape[1]
        w = w_ref[woff:woff + rows, :]        # full 128 lanes; unused cols are 0
        y = jnp.dot(lhs.astype(bf16), w, preferred_element_type=f32)
        if brow is not None:
            y = y + b_ref[brow:brow + 1, :]
        return y

    xm = x_ref[0]                             # (B, x_pad) = [obs | msg | 0]
    state = state_ref[...]
    h_prev = state[:, 0:2 * M]                # [hA_prev | hM_prev]
    cA_prev = state[:, 2 * M:3 * M]
    cM_prev = state[:, 3 * M:4 * M]

    # stage 1: both obs encoders + both msg encoders (layer 1), one dot
    s1 = mm(xm, L.w1, brow=L.b1)
    enc = relu(s1[:, 0:L.n1])                 # [oA | oM | m1A | m1M]

    # both LSTM h-projections (b_ih + b_hh folded into the bias row), one dot
    gh = mm(h_prev, L.whh, brow=L.bhh)
    gates_hA = gh[:, 0:G]
    gates_hM = gh[:, G:2 * G]

    # stage 2: rep1 obs-enc contributions (A,M) + msg-enc layer 2 (A,M)
    s2 = mm(enc, L.w2, brow=L.b2)
    repo = s2[:, 0:2 * H]                     # obs/msg-enc contribution + brA/br1M
    m2 = relu(s2[:, L.c_m2A:L.c_m2A + 2 * H2])

    # stage 3: rep1 msg contribution + combine -> [zA | z1M]
    rep1 = relu(mm(m2, L.w3)[:, 0:2 * H] + repo)

    # stage 4: actor LSTM x-projection + critic rep2 (block-diagonal fuse)
    s4 = mm(rep1, L.w4, brow=L.b4)
    gates_A = s4[:, 0:G] + gates_hA
    z = relu(s4[:, L.c_z2:L.c_z2 + H])

    def lstm(gates, c_prev):                  # torch LSTMCell order (i, f, g, o)
        i_g = sig(gates[:, 0:M])
        f_g = sig(gates[:, M:2 * M])
        g_g = jnp.tanh(gates[:, 2 * M:3 * M])
        o_g = sig(gates[:, 3 * M:4 * M])
        c_new = f_g * c_prev + i_g * g_g
        return o_g * jnp.tanh(c_new), c_new

    hA, cA = lstm(gates_A, cA_prev)

    # critic chain: rep3, rep4, LSTM x-projection, LSTM cell
    z = relu(mm(z, L.wr3, brow=L.br3)[:, 0:H])
    z = relu(mm(z, L.wr4, brow=L.br4)[:, 0:H])
    gates_M = mm(z, L.wih)[:, 0:G] + gates_hM
    hM, cM = lstm(gates_M, cM_prev)

    # carry recurrent state in VMEM (never touches HBM between steps)
    h_new = jnp.concatenate([hA, hM], axis=-1)
    state_ref[...] = jnp.concatenate([h_new, cA, cM], axis=-1)

    # fused heads: one dot gives message logits (collapsed Wd1@Wd2), action
    # logit and value (collapsed Wv1@Wv2)
    heads = mm(h_new, L.whd, brow=L.bhd)
    logits = heads[:, 0:V]
    action = sig(heads[:, L.c_act:L.c_act + 1])
    value = heads[:, L.c_val:L.c_val + 1]
    logits = logits - jnp.max(logits, axis=-1, keepdims=True)
    e = jnp.exp(logits)
    message = e * pl.reciprocal(jnp.sum(e, axis=-1, keepdims=True), approx=True)

    # single lane-dense per-step store
    pad = out_ref.shape[2] - L.o_width
    out_ref[0] = jnp.concatenate(
        [action, value, hA, cA, hM, cM, message, jnp.zeros((B, pad), f32)],
        axis=-1)


# ----------------------------------------------------------------------------
# Host-side parameter fusion + packing (bf16 weight slab, f32 bias slab)
# ----------------------------------------------------------------------------
_PARAM_NAMES = (
    "WoA", "boA", "Wm1A", "bm1A", "Wm2A", "bm2A", "WrA", "brA",
    "WihA", "WhhA", "bihA", "bhhA",
    "Wact", "bact", "Wd1", "bd1", "Wd2", "bd2",
    "WoM", "boM", "Wm1M", "bm1M", "Wm2M", "bm2M",
    "Wr1M", "br1M", "Wr2M", "br2M", "Wr3M", "br3M", "Wr4M", "br4M",
    "WihM", "WhhM", "bihM", "bhhM",
    "Wv1", "bv1", "Wv2", "bv2",
)


def _unpack_params(params):
    assert len(params) == len(_PARAM_NAMES)
    return dict(zip(_PARAM_NAMES, params))


def pack_params(params, hidden_dim, memory_size, vocab):
    L = _Layout(hidden_dim, memory_size, vocab)
    H, H2, M, V = L.H, L.H2, L.M, L.V
    p = {k: np.asarray(v, np.float32) for k, v in _unpack_params(params).items()}

    W = np.zeros((L.w_rows, LANES), np.float32)
    Bm = np.zeros((L.b_rows, LANES), np.float32)

    def put(r, c, a):
        W[r:r + a.shape[0], c:c + a.shape[1]] = a

    def putb(row, c, a):
        a = a.reshape(-1)
        Bm[row, c:c + a.shape[0]] = a

    # W1: rows [obs(2) | msg(V)] -> [oA | oM | m1A | m1M]
    put(L.w1 + 0, L.c_oA, p["WoA"]);  put(L.w1 + 0, L.c_oM, p["WoM"])
    put(L.w1 + 2, L.c_m1A, p["Wm1A"]); put(L.w1 + 2, L.c_m1M, p["Wm1M"])
    putb(L.b1, L.c_oA, p["boA"]);  putb(L.b1, L.c_oM, p["boM"])
    putb(L.b1, L.c_m1A, p["bm1A"]); putb(L.b1, L.c_m1M, p["bm1M"])

    # Whh: rows [hA | hM] -> [gates_hA | gates_hM]; b_ih + b_hh folded here
    put(L.whh + 0, L.c_ghA, p["WhhA"]); put(L.whh + M, L.c_ghM, p["WhhM"])
    putb(L.bhh, L.c_ghA, p["bihA"] + p["bhhA"])
    putb(L.bhh, L.c_ghM, p["bihM"] + p["bhhM"])

    # W2: rows = enc lanes [oA | oM | m1A | m1M]
    put(L.w2 + 0 * H2, L.c_repA, p["WrA"][:H2, :])
    put(L.w2 + 1 * H2, L.c_repM, p["Wr1M"][:H2, :])
    put(L.w2 + 2 * H2, L.c_m2A, p["Wm2A"])
    put(L.w2 + 3 * H2, L.c_m2M, p["Wm2M"])
    putb(L.b2, L.c_repA, p["brA"]); putb(L.b2, L.c_repM, p["br1M"])
    putb(L.b2, L.c_m2A, p["bm2A"]); putb(L.b2, L.c_m2M, p["bm2M"])

    # W3: rows [m2A | m2M] -> rep1 msg contribution (bias carried by W2 cols)
    put(L.w3 + 0, 0, p["WrA"][H2:, :])
    put(L.w3 + H2, H, p["Wr1M"][H2:, :])

    # W4: rows [zA | z1M] -> [actor gates_x | critic rep2]
    put(L.w4 + 0, L.c_gxA, p["WihA"])
    put(L.w4 + H, L.c_z2, p["Wr2M"])
    putb(L.b4, L.c_z2, p["br2M"])

    # critic chain
    put(L.wr3, 0, p["Wr3M"]); putb(L.br3, 0, p["br3M"])
    put(L.wr4, 0, p["Wr4M"]); putb(L.br4, 0, p["br4M"])
    put(L.wih, 0, p["WihM"])

    # fused heads: rows [hA | hM] -> [message | action | value]
    Wd = p["Wd1"] @ p["Wd2"]
    bd = p["bd1"] @ p["Wd2"] + p["bd2"]
    Wv = p["Wv1"] @ p["Wv2"]
    bv = p["bv1"] @ p["Wv2"] + p["bv2"]
    put(L.whd + 0, L.c_msg, Wd)
    put(L.whd + 0, L.c_act, p["Wact"])
    put(L.whd + M, L.c_val, Wv)
    putb(L.bhd, L.c_msg, bd); putb(L.bhd, L.c_act, p["bact"]); putb(L.bhd, L.c_val, bv)

    return jnp.asarray(W, jnp.bfloat16), jnp.asarray(Bm, jnp.float32)


# ----------------------------------------------------------------------------
# Wrappers
# ----------------------------------------------------------------------------
def aria_forward_seq(obs, msg, memA, memM, wslab, bslab, *,
                     hidden_dim, memory_size, vocab, batch_tile=None):
    """Roll the ariaModelSplit cell over a (T, B, ...) sequence in ONE kernel."""
    L = _Layout(hidden_dim, memory_size, vocab)
    M = memory_size
    T, B = obs.shape[0], obs.shape[1]
    bt = batch_tile or B
    assert B % bt == 0 and (bt % 8 == 0 or bt == B)
    f32 = jnp.float32

    # per-step encoder input (one concat for the whole sequence)
    x = jnp.concatenate([obs.astype(f32), msg.astype(f32)], axis=-1)
    if L.x_pad > L.x_in:
        x = jnp.concatenate([x, jnp.zeros((T, B, L.x_pad - L.x_in), f32)], axis=-1)
    # initial recurrent state in kernel layout [hA | hM | cA | cM]
    init = jnp.concatenate([memA[:, :M], memM[:, :M], memA[:, M:], memM[:, M:]],
                           axis=-1).astype(f32)

    grid_spec = pltpu.PrefetchScalarGridSpec(
        num_scalar_prefetch=0,
        grid=(B // bt, T),
        in_specs=[
            pl.BlockSpec((1, bt, L.x_pad), lambda b, t: (t, b, 0)),   # streamed
            pl.BlockSpec((bt, L.s_width), lambda b, t: (b, 0)),       # resident
            pl.BlockSpec((L.w_rows, LANES), lambda b, t: (0, 0)),     # resident
            pl.BlockSpec((L.b_rows, LANES), lambda b, t: (0, 0)),     # resident
        ],
        out_specs=pl.BlockSpec((1, bt, LANES), lambda b, t: (t, b, 0)),
        scratch_shapes=[pltpu.VMEM((bt, L.s_width), f32)],            # hA/cA/hM/cM
    )
    out = pl.pallas_call(
        functools.partial(aria_seq_kernel, hidden_dim=hidden_dim,
                          memory_size=memory_size, vocab=vocab),
        out_shape=jax.ShapeDtypeStruct((T, B, LANES), f32),
        grid_spec=grid_spec,
        compiler_params=pltpu.CompilerParams(
            dimension_semantics=("parallel", "arbitrary")),
    )(x, init, wslab, bslab)

    action = out[:, :, L.o_action:L.o_action + 1]
    value = out[:, :, L.o_value:L.o_value + 1]
    out_memA = out[:, :, L.o_memA:L.o_memA + 2 * M]
    out_memM = out[:, :, L.o_memM:L.o_memM + 2 * M]
    message = out[:, :, L.o_msg:L.o_msg + vocab]
    return action, message, out_memA, out_memM, value


def aria_forward_step(obs, msg, memA, memM, wslab, bslab, **kw):
    """Single-step forward, matching ariaModelSplit.forward semantics."""
    outs = aria_forward_seq(obs[None], msg[None], memA, memM, wslab, bslab, **kw)
    return tuple(o[0] for o in outs)


# ----------------------------------------------------------------------------
# Deterministic parameter construction (torch default init style)
# ----------------------------------------------------------------------------
def make_params(key, vocab, hidden_dim, memory_size):
    H2 = hidden_dim // 2
    keys = iter(jax.random.split(key, 64))
    params = []

    def lin(fan_in, fan_out):
        k1, k2 = jax.random.split(next(keys))
        bound = 1.0 / math.sqrt(fan_in)
        params.extend([
            jax.random.uniform(k1, (fan_in, fan_out), jnp.float32, -bound, bound),
            jax.random.uniform(k2, (1, fan_out), jnp.float32, -bound, bound)])

    def lstm(in_dim, mem):
        k1, k2, k3, k4 = jax.random.split(next(keys), 4)
        bound = 1.0 / math.sqrt(mem)
        params.extend([
            jax.random.uniform(k1, (in_dim, 4 * mem), jnp.float32, -bound, bound),
            jax.random.uniform(k2, (mem, 4 * mem), jnp.float32, -bound, bound),
            jax.random.uniform(k3, (1, 4 * mem), jnp.float32, -bound, bound),
            jax.random.uniform(k4, (1, 4 * mem), jnp.float32, -bound, bound)])

    # actor
    lin(2, H2)                                   # obs_Mod_A
    lin(vocab, H2); lin(H2, H2)                  # msg_Enc_A
    lin(hidden_dim, hidden_dim)                  # rep_Mod_A
    lstm(hidden_dim, memory_size)                # memory_A
    lin(memory_size, 1)                          # action_Mod
    lin(memory_size, memory_size); lin(memory_size, vocab)   # msg_Dec
    # critic
    lin(2, H2)                                   # obs_Mod_M
    lin(vocab, H2); lin(H2, H2)                  # msg_Enc_M
    for _ in range(4):                           # rep_Mod_M
        lin(hidden_dim, hidden_dim)
    lstm(hidden_dim, memory_size)                # memory_M
    lin(memory_size, memory_size); lin(memory_size, 1)        # value_head
    return params


# ----------------------------------------------------------------------------
# Pure-JAX reference (mirrors the PyTorch forward exactly) for verification
# ----------------------------------------------------------------------------
def ref_forward(obs, msg, memA, memM, params, memory_size):
    p = _unpack_params(params)
    relu = lambda v: jnp.maximum(v, 0.0)
    sig = jax.nn.sigmoid
    M = memory_size

    def lstm(x, h, c, Wih, Whh, bih, bhh):
        g = x @ Wih + bih + h @ Whh + bhh
        i, f, gg, o = jnp.split(g, 4, axis=-1)
        c2 = sig(f) * c + sig(i) * jnp.tanh(gg)
        return sig(o) * jnp.tanh(c2), c2

    oA = relu(obs @ p["WoA"] + p["boA"])
    mA = relu(relu(msg @ p["Wm1A"] + p["bm1A"]) @ p["Wm2A"] + p["bm2A"])
    zA = relu(jnp.concatenate([oA, mA], -1) @ p["WrA"] + p["brA"])
    hA, cA = lstm(zA, memA[:, :M], memA[:, M:],
                  p["WihA"], p["WhhA"], p["bihA"], p["bhhA"])
    action = sig(hA @ p["Wact"] + p["bact"])
    message = jax.nn.softmax((hA @ p["Wd1"] + p["bd1"]) @ p["Wd2"] + p["bd2"], axis=-1)
    outA = jnp.concatenate([hA, cA], axis=1)

    oM = relu(obs @ p["WoM"] + p["boM"])
    mM = relu(relu(msg @ p["Wm1M"] + p["bm1M"]) @ p["Wm2M"] + p["bm2M"])
    z = jnp.concatenate([oM, mM], -1)
    for Wn, bn in (("Wr1M", "br1M"), ("Wr2M", "br2M"),
                   ("Wr3M", "br3M"), ("Wr4M", "br4M")):
        z = relu(z @ p[Wn] + p[bn])
    hM, cM = lstm(z, memM[:, :M], memM[:, M:],
                  p["WihM"], p["WhhM"], p["bihM"], p["bhhM"])
    value = (hM @ p["Wv1"] + p["bv1"]) @ p["Wv2"] + p["bv2"]
    outM = jnp.concatenate([hM, cM], axis=1)
    return action, message, outA, outM, value


# ----------------------------------------------------------------------------
if __name__ == "__main__":
    B, V, H, M, T = 8, 8, 16, 8, 6   # batch, vocab, hidden_dim, memory_size, steps

    root = jax.random.PRNGKey(0)
    k_params, k_obs, k_msg, k_ma, k_mm = jax.random.split(root, 5)

    params = make_params(k_params, V, H, M)
    # Kernel consumes weights in bf16; round once so the f32 reference uses the
    # exact same weight values and the comparison stays tight.
    params = [p.astype(jnp.bfloat16).astype(jnp.float32) for p in params]
    wslab, bslab = pack_params(params, H, M, V)   # packed once, reused per rollout

    obs_seq = jax.random.normal(k_obs, (T, B, 2), jnp.float32)
    msg_seq = jax.nn.one_hot(jax.random.randint(k_msg, (T, B), 0, V), V,
                             dtype=jnp.float32)
    memA0 = 0.1 * jax.random.normal(k_ma, (B, 2 * M), jnp.float32)
    memM0 = 0.1 * jax.random.normal(k_mm, (B, 2 * M), jnp.float32)

    fwd = jax.jit(functools.partial(aria_forward_seq, hidden_dim=H,
                                    memory_size=M, vocab=V))
    outs = fwd(obs_seq, msg_seq, memA0, memM0, wslab, bslab)
    outs = jax.block_until_ready(outs)

    # reference: roll the single-step pure-JAX forward over the same sequence
    mA, mM = memA0, memM0
    steps = []
    for t in range(T):
        a, m, oA, oM, v = ref_forward(obs_seq[t], msg_seq[t], mA, mM, params, M)
        steps.append((a, m, oA, oM, v))
        mA, mM = oA, oM
    refs = tuple(jnp.stack(x) for x in zip(*steps))

    names = ("action", "message", "out_memory_A", "out_memory_M", "value")
    for name, got, want in zip(names, outs, refs):
        assert got.shape == want.shape, (name, got.shape, want.shape)
        err = float(jnp.max(jnp.abs(got - want)))
        # bf16 matmuls + approx softmax reciprocal -> relaxed tolerance
        assert jnp.allclose(got, want, atol=2e-2, rtol=2e-2), (name, err)

    print("KERNEL_OK")
</pallas_src>

<mosaic_0001>
module attributes {stable_mosaic.version = 11 : i64} {
  func.func @aria_seq_kernel(%arg0: i32, %arg1: i32, %arg2: memref<1x8x16xf32, #tpu.memory_space<vmem>>, %arg3: memref<8x32xf32, #tpu.memory_space<vmem>>, %arg4: memref<176x128xbf16, #tpu.memory_space<vmem>>, %arg5: memref<8x128xf32, #tpu.memory_space<vmem>>, %arg6: memref<1x8x128xf32, #tpu.memory_space<vmem>>, %arg7: memref<8x32xf32, #tpu.memory_space<vmem>>) attributes {dimension_semantics = [#tpu.dimension_semantics<parallel>, #tpu.dimension_semantics<arbitrary>], iteration_bounds = array<i64: 1, 6>, scalar_prefetch = 0 : i64, scratch_operands = 1 : i64, tpu.core_type = #tpu.core_type<tc>, window_params = [{transform_indices = @transform_0, window_bounds = array<i64: 1, 8, 16>}, {transform_indices = @transform_1, window_bounds = array<i64: 8, 32>}, {pipeline_mode = #tpu.pipeline_mode<synchronous>, transform_indices = @transform_2, window_bounds = array<i64: 176, 128>}, {pipeline_mode = #tpu.pipeline_mode<synchronous>, transform_indices = @transform_3, window_bounds = array<i64: 8, 128>}, {transform_indices = @transform_4, window_bounds = array<i64: 1, 8, 128>}]} {
    %c0_i32 = arith.constant 0 : i32
    %0 = arith.cmpi eq, %arg1, %c0_i32 : i32
    %1 = arith.extui %0 : i1 to i32
    %c0_i32_0 = arith.constant 0 : i32
    %2 = arith.cmpi ne, %1, %c0_i32_0 : i32
    scf.if %2 {
      %c0_52 = arith.constant 0 : index
      %c0_53 = arith.constant 0 : index
      %159 = vector.load %arg3[%c0_52, %c0_53] : memref<8x32xf32, #tpu.memory_space<vmem>>, vector<8x32xf32>
      %c0_54 = arith.constant 0 : index
      %c0_55 = arith.constant 0 : index
      %160 = vector.load %arg7[%c0_54, %c0_55] : memref<8x32xf32, #tpu.memory_space<vmem>>, vector<8x32xf32>
      tpu.vector_store %arg7[%c0_54, %c0_55], %159 {strides = array<i32>} : memref<8x32xf32, #tpu.memory_space<vmem>>, vector<8x32xf32>,
    } else {
    }
    %c0 = arith.constant 0 : index
    %c0_1 = arith.constant 0 : index
    %c0_2 = arith.constant 0 : index
    %3 = vector.load %arg2[%c0, %c0_1, %c0_2] : memref<1x8x16xf32, #tpu.memory_space<vmem>>, vector<1x8x16xf32>
    %4 = vector.shape_cast %3 : vector<1x8x16xf32> to vector<8x16xf32>
    %c0_3 = arith.constant 0 : index
    %c0_4 = arith.constant 0 : index
    %5 = vector.load %arg7[%c0_3, %c0_4] : memref<8x32xf32, #tpu.memory_space<vmem>>, vector<8x32xf32>
    %6 = vector.extract_strided_slice %5 {offsets = [0, 0], sizes = [8, 16], strides = [1, 1]} : vector<8x32xf32> to vector<8x16xf32>
    %7 = vector.extract_strided_slice %5 {offsets = [0, 16], sizes = [8, 8], strides = [1, 1]} : vector<8x32xf32> to vector<8x8xf32>
    %8 = vector.extract_strided_slice %5 {offsets = [0, 24], sizes = [8, 8], strides = [1, 1]} : vector<8x32xf32> to vector<8x8xf32>
    %c0_5 = arith.constant 0 : index
    %c0_6 = arith.constant 0 : index
    %9 = vector.load %arg4[%c0_5, %c0_6] : memref<176x128xbf16, #tpu.memory_space<vmem>>, vector<16x128xbf16>
    %10 = arith.truncf %4 : vector<8x16xf32> to vector<8x16xbf16>
    %cst = arith.constant dense<0.000000e+00> : vector<8x128xf32>
    %11 = tpu.matmul %10, %9, %cst {dimension_numbers = #tpu.dot_dimension_numbers<[1], [0], [0], [1], [0, 0, 1, 1], [], []>} : vector<8x16xbf16>, vector<16x128xbf16>, vector<8x128xf32> -> vector<8x128xf32>
    %c0_7 = arith.constant 0 : index
    %c0_8 = arith.constant 0 : index
    %12 = vector.load %arg5[%c0_7, %c0_8] : memref<8x128xf32, #tpu.memory_space<vmem>>, vector<1x128xf32>
    %13 = vector.broadcast %12 : vector<1x128xf32> to vector<8x128xf32>
    %14 = arith.addf %11, %13 : vector<8x128xf32>
    %15 = vector.extract_strided_slice %14 {offsets = [0, 0], sizes = [8, 32], strides = [1, 1]} : vector<8x128xf32> to vector<8x32xf32>
    %cst_9 = arith.constant 0.000000e+00 : f32
    %16 = vector.broadcast %cst_9 : f32 to vector<8x32xf32>
    %17 = arith.maximumf %15, %16 : vector<8x32xf32>
    %c16 = arith.constant 16 : index
    %c0_10 = arith.constant 0 : index
    %18 = vector.load %arg4[%c16, %c0_10] : memref<176x128xbf16, #tpu.memory_space<vmem>>, vector<16x128xbf16>
    %19 = arith.truncf %6 : vector<8x16xf32> to vector<8x16xbf16>
    %cst_11 = arith.constant dense<0.000000e+00> : vector<8x128xf32>
    %20 = tpu.matmul %19, %18, %cst_11 {dimension_numbers = #tpu.dot_dimension_numbers<[1], [0], [0], [1], [0, 0, 1, 1], [], []>} : vector<8x16xbf16>, vector<16x128xbf16>, vector<8x128xf32> -> vector<8x128xf32>
    %c1 = arith.constant 1 : index
    %c0_12 = arith.constant 0 : index
    %21 = vector.load %arg5[%c1, %c0_12] : memref<8x128xf32, #tpu.memory_space<vmem>>, vector<1x128xf32>
    %22 = vector.broadcast %21 : vector<1x128xf32> to vector<8x128xf32>
    %23 = arith.addf %20, %22 : vector<8x128xf32>
    %24 = vector.extract_strided_slice %23 {offsets = [0, 0], sizes = [8, 32], strides = [1, 1]} : vector<8x128xf32> to vector<8x32xf32>
    %25 = vector.extract_strided_slice %23 {offsets = [0, 32], sizes = [8, 32], strides = [1, 1]} : vector<8x128xf32> to vector<8x32xf32>
    %c32 = arith.constant 32 : index
    %c0_13 = arith.constant 0 : index
    %26 = vector.load %arg4[%c32, %c0_13] : memref<176x128xbf16, #tpu.memory_space<vmem>>, vector<32x128xbf16>
    %27 = arith.truncf %17 : vector<8x32xf32> to vector<8x32xbf16>
    %cst_14 = arith.constant dense<0.000000e+00> : vector<8x128xf32>
    %28 = tpu.matmul %27, %26, %cst_14 {dimension_numbers = #tpu.dot_dimension_numbers<[1], [0], [0], [1], [0, 0, 1, 1], [], []>} : vector<8x32xbf16>, vector<32x128xbf16>, vector<8x128xf32> -> vector<8x128xf32>
    %c2 = arith.constant 2 : index
    %c0_15 = arith.constant 0 : index
    %29 = vector.load %arg5[%c2, %c0_15] : memref<8x128xf32, #tpu.memory_space<vmem>>, vector<1x128xf32>
    %30 = vector.broadcast %29 : vector<1x128xf32> to vector<8x128xf32>
    %31 = arith.addf %28, %30 : vector<8x128xf32>
    %32 = vector.extract_strided_slice %31 {offsets = [0, 0], sizes = [8, 32], strides = [1, 1]} : vector<8x128xf32> to vector<8x32xf32>
    %33 = vector.extract_strided_slice %31 {offsets = [0, 32], sizes = [8, 16], strides = [1, 1]} : vector<8x128xf32> to vector<8x16xf32>
    %cst_16 = arith.constant 0.000000e+00 : f32
    %34 = vector.broadcast %cst_16 : f32 to vector<8x16xf32>
    %35 = arith.maximumf %33, %34 : vector<8x16xf32>
    %c64 = arith.constant 64 : index
    %c0_17 = arith.constant 0 : index
    %36 = vector.load %arg4[%c64, %c0_17] : memref<176x128xbf16, #tpu.memory_space<vmem>>, vector<16x128xbf16>
    %37 = arith.truncf %35 : vector<8x16xf32> to vector<8x16xbf16>
    %cst_18 = arith.constant dense<0.000000e+00> : vector<8x128xf32>
    %38 = tpu.matmul %37, %36, %cst_18 {dimension_numbers = #tpu.dot_dimension_numbers<[1], [0], [0], [1], [0, 0, 1, 1], [], []>} : vector<8x16xbf16>, vector<16x128xbf16>, vector<8x128xf32> -> vector<8x128xf32>
    %39 = vector.extract_strided_slice %38 {offsets = [0, 0], sizes = [8, 32], strides = [1, 1]} : vector<8x128xf32> to vector<8x32xf32>
    %40 = arith.addf %39, %32 : vector<8x32xf32>
    %cst_19 = arith.constant 0.000000e+00 : f32
    %41 = vector.broadcast %cst_19 : f32 to vector<8x32xf32>
    %42 = arith.maximumf %40, %41 : vector<8x32xf32>
    %c80 = arith.constant 80 : index
    %c0_20 = arith.constant 0 : index
    %43 = vector.load %arg4[%c80, %c0_20] : memref<176x128xbf16, #tpu.memory_space<vmem>>, vector<32x128xbf16>
    %44 = arith.truncf %42 : vector<8x32xf32> to vector<8x32xbf16>
    %cst_21 = arith.constant dense<0.000000e+00> : vector<8x128xf32>
    %45 = tpu.matmul %44, %43, %cst_21 {dimension_numbers = #tpu.dot_dimension_numbers<[1], [0], [0], [1], [0, 0, 1, 1], [], []>} : vector<8x32xbf16>, vector<32x128xbf16>, vector<8x128xf32> -> vector<8x128xf32>
    %c3 = arith.constant 3 : index
    %c0_22 = arith.constant 0 : index
    %46 = vector.load %arg5[%c3, %c0_22] : memref<8x128xf32, #tpu.memory_space<vmem>>, vector<1x128xf32>
    %47 = vector.broadcast %46 : vector<1x128xf32> to vector<8x128xf32>
    %48 = arith.addf %45, %47 : vector<8x128xf32>
    %49 = vector.extract_strided_slice %48 {offsets = [0, 0], sizes = [8, 32], strides = [1, 1]} : vector<8x128xf32> to vector<8x32xf32>
    %50 = arith.addf %49, %24 : vector<8x32xf32>
    %51 = vector.extract_strided_slice %48 {offsets = [0, 32], sizes = [8, 16], strides = [1, 1]} : vector<8x128xf32> to vector<8x16xf32>
    %cst_23 = arith.constant 0.000000e+00 : f32
    %52 = vector.broadcast %cst_23 : f32 to vector<8x16xf32>
    %53 = arith.maximumf %51, %52 : vector<8x16xf32>
    %54 = vector.extract_strided_slice %50 {offsets = [0, 0], sizes = [8, 8], strides = [1, 1]} : vector<8x32xf32> to vector<8x8xf32>
    %55 = arith.negf %54 : vector<8x8xf32>
    %56 = math.exp %55 : vector<8x8xf32>
    %cst_24 = arith.constant 1.000000e+00 : f32
    %57 = vector.broadcast %cst_24 : f32 to vector<8x8xf32>
    %58 = arith.addf %57, %56 : vector<8x8xf32>
    %59 = arith.divf %57, %58 : vector<8x8xf32>
    %60 = vector.extract_strided_slice %50 {offsets = [0, 8], sizes = [8, 8], strides = [1, 1]} : vector<8x32xf32> to vector<8x8xf32>
    %61 = arith.negf %60 : vector<8x8xf32>
    %62 = math.exp %61 : vector<8x8xf32>
    %cst_25 = arith.constant 1.000000e+00 : f32
    %63 = vector.broadcast %cst_25 : f32 to vector<8x8xf32>
    %64 = arith.addf %63, %62 : vector<8x8xf32>
    %65 = arith.divf %63, %64 : vector<8x8xf32>
    %66 = vector.extract_strided_slice %50 {offsets = [0, 16], sizes = [8, 8], strides = [1, 1]} : vector<8x32xf32> to vector<8x8xf32>
    %67 = math.tanh %66 : vector<8x8xf32>
    %68 = vector.extract_strided_slice %50 {offsets = [0, 24], sizes = [8, 8], strides = [1, 1]} : vector<8x32xf32> to vector<8x8xf32>
    %69 = arith.negf %68 : vector<8x8xf32>
    %70 = math.exp %69 : vector<8x8xf32>
    %cst_26 = arith.constant 1.000000e+00 : f32
    %71 = vector.broadcast %cst_26 : f32 to vector<8x8xf32>
    %72 = arith.addf %71, %70 : vector<8x8xf32>
    %73 = arith.divf %71, %72 : vector<8x8xf32>
    %74 = arith.mulf %65, %7 : vector<8x8xf32>
    %75 = arith.mulf %59, %67 : vector<8x8xf32>
    %76 = arith.addf %74, %75 : vector<8x8xf32>
    %77 = math.tanh %76 : vector<8x8xf32>
    %78 = arith.mulf %73, %77 : vector<8x8xf32>
    %c112 = arith.constant 112 : index
    %c0_27 = arith.constant 0 : index
    %79 = vector.load %arg4[%c112, %c0_27] : memref<176x128xbf16, #tpu.memory_space<vmem>>, vector<16x128xbf16>
    %80 = arith.truncf %53 : vector<8x16xf32> to vector<8x16xbf16>
    %cst_28 = arith.constant dense<0.000000e+00> : vector<8x128xf32>
    %81 = tpu.matmul %80, %79, %cst_28 {dimension_numbers = #tpu.dot_dimension_numbers<[1], [0], [0], [1], [0, 0, 1, 1], [], []>} : vector<8x16xbf16>, vector<16x128xbf16>, vector<8x128xf32> -> vector<8x128xf32>
    %c4 = arith.constant 4 : index
    %c0_29 = arith.constant 0 : index
    %82 = vector.load %arg5[%c4, %c0_29] : memref<8x128xf32, #tpu.memory_space<vmem>>, vector<1x128xf32>
    %83 = vector.broadcast %82 : vector<1x128xf32> to vector<8x128xf32>
    %84 = arith.addf %81, %83 : vector<8x128xf32>
    %85 = vector.extract_strided_slice %84 {offsets = [0, 0], sizes = [8, 16], strides = [1, 1]} : vector<8x128xf32> to vector<8x16xf32>
    %cst_30 = arith.constant 0.000000e+00 : f32
    %86 = vector.broadcast %cst_30 : f32 to vector<8x16xf32>
    %87 = arith.maximumf %85, %86 : vector<8x16xf32>
    %c128 = arith.constant 128 : index
    %c0_31 = arith.constant 0 : index
    %88 = vector.load %arg4[%c128, %c0_31] : memref<176x128xbf16, #tpu.memory_space<vmem>>, vector<16x128xbf16>
    %89 = arith.truncf %87 : vector<8x16xf32> to vector<8x16xbf16>
    %cst_32 = arith.constant dense<0.000000e+00> : vector<8x128xf32>
    %90 = tpu.matmul %89, %88, %cst_32 {dimension_numbers = #tpu.dot_dimension_numbers<[1], [0], [0], [1], [0, 0, 1, 1], [], []>} : vector<8x16xbf16>, vector<16x128xbf16>, vector<8x128xf32> -> vector<8x128xf32>
    %c5 = arith.constant 5 : index
    %c0_33 = arith.constant 0 : index
    %91 = vector.load %arg5[%c5, %c0_33] : memref<8x128xf32, #tpu.memory_space<vmem>>, vector<1x128xf32>
    %92 = vector.broadcast %91 : vector<1x128xf32> to vector<8x128xf32>
    %93 = arith.addf %90, %92 : vector<8x128xf32>
    %94 = vector.extract_strided_slice %93 {offsets = [0, 0], sizes = [8, 16], strides = [1, 1]} : vector<8x128xf32> to vector<8x16xf32>
    %cst_34 = arith.constant 0.000000e+00 : f32
    %95 = vector.broadcast %cst_34 : f32 to vector<8x16xf32>
    %96 = arith.maximumf %94, %95 : vector<8x16xf32>
    %c144 = arith.constant 144 : index
    %c0_35 = arith.constant 0 : index
    %97 = vector.load %arg4[%c144, %c0_35] : memref<176x128xbf16, #tpu.memory_space<vmem>>, vector<16x128xbf16>
    %98 = arith.truncf %96 : vector<8x16xf32> to vector<8x16xbf16>
    %cst_36 = arith.constant dense<0.000000e+00> : vector<8x128xf32>
    %99 = tpu.matmul %98, %97, %cst_36 {dimension_numbers = #tpu.dot_dimension_numbers<[1], [0], [0], [1], [0, 0, 1, 1], [], []>} : vector<8x16xbf16>, vector<16x128xbf16>, vector<8x128xf32> -> vector<8x128xf32>
    %100 = vector.extract_strided_slice %99 {offsets = [0, 0], sizes = [8, 32], strides = [1, 1]} : vector<8x128xf32> to vector<8x32xf32>
    %101 = arith.addf %100, %25 : vector<8x32xf32>
    %102 = vector.extract_strided_slice %101 {offsets = [0, 0], sizes = [8, 8], strides = [1, 1]} : vector<8x32xf32> to vector<8x8xf32>
    %103 = arith.negf %102 : vector<8x8xf32>
    %104 = math.exp %103 : vector<8x8xf32>
    %cst_37 = arith.constant 1.000000e+00 : f32
    %105 = vector.broadcast %cst_37 : f32 to vector<8x8xf32>
    %106 = arith.addf %105, %104 : vector<8x8xf32>
    %107 = arith.divf %105, %106 : vector<8x8xf32>
    %108 = vector.extract_strided_slice %101 {offsets = [0, 8], sizes = [8, 8], strides = [1, 1]} : vector<8x32xf32> to vector<8x8xf32>
    %109 = arith.negf %108 : vector<8x8xf32>
    %110 = math.exp %109 : vector<8x8xf32>
    %cst_38 = arith.constant 1.000000e+00 : f32
    %111 = vector.broadcast %cst_38 : f32 to vector<8x8xf32>
    %112 = arith.addf %111, %110 : vector<8x8xf32>
    %113 = arith.divf %111, %112 : vector<8x8xf32>
    %114 = vector.extract_strided_slice %101 {offsets = [0, 16], sizes = [8, 8], strides = [1, 1]} : vector<8x32xf32> to vector<8x8xf32>
    %115 = math.tanh %114 : vector<8x8xf32>
    %116 = vector.extract_strided_slice %101 {offsets = [0, 24], sizes = [8, 8], strides = [1, 1]} : vector<8x32xf32> to vector<8x8xf32>
    %117 = arith.negf %116 : vector<8x8xf32>
    %118 = math.exp %117 : vector<8x8xf32>
    %cst_39 = arith.constant 1.000000e+00 : f32
    %119 = vector.broadcast %cst_39 : f32 to vector<8x8xf32>
    %120 = arith.addf %119, %118 : vector<8x8xf32>
    %121 = arith.divf %119, %120 : vector<8x8xf32>
    %122 = arith.mulf %113, %8 : vector<8x8xf32>
    %123 = arith.mulf %107, %115 : vector<8x8xf32>
    %124 = arith.addf %122, %123 : vector<8x8xf32>
    %125 = math.tanh %124 : vector<8x8xf32>
    %126 = arith.mulf %121, %125 : vector<8x8xf32>
    %127 = tpu.concatenate %78, %126 in 1 : vector<8x8xf32>, vector<8x8xf32> -> vector<8x16xf32>
    %128 = tpu.concatenate %127, %76, %124 in 1 : vector<8x16xf32>, vector<8x8xf32>, vector<8x8xf32> -> vector<8x32xf32>
    %c0_40 = arith.constant 0 : index
    %c0_41 = arith.constant 0 : index
    %129 = vector.load %arg7[%c0_40, %c0_41] : memref<8x32xf32, #tpu.memory_space<vmem>>, vector<8x32xf32>
    tpu.vector_store %arg7[%c0_40, %c0_41], %128 {strides = array<i32>} : memref<8x32xf32, #tpu.memory_space<vmem>>, vector<8x32xf32>,
    %c160 = arith.constant 160 : index
    %c0_42 = arith.constant 0 : index
    %130 = vector.load %arg4[%c160, %c0_42] : memref<176x128xbf16, #tpu.memory_space<vmem>>, vector<16x128xbf16>
    %131 = arith.truncf %127 : vector<8x16xf32> to vector<8x16xbf16>
    %cst_43 = arith.constant dense<0.000000e+00> : vector<8x128xf32>
    %132 = tpu.matmul %131, %130, %cst_43 {dimension_numbers = #tpu.dot_dimension_numbers<[1], [0], [0], [1], [0, 0, 1, 1], [], []>} : vector<8x16xbf16>, vector<16x128xbf16>, vector<8x128xf32> -> vector<8x128xf32>
    %c6 = arith.constant 6 : index
    %c0_44 = arith.constant 0 : index
    %133 = vector.load %arg5[%c6, %c0_44] : memref<8x128xf32, #tpu.memory_space<vmem>>, vector<1x128xf32>
    %134 = vector.broadcast %133 : vector<1x128xf32> to vector<8x128xf32>
    %135 = arith.addf %132, %134 : vector<8x128xf32>
    %136 = vector.extract_strided_slice %135 {offsets = [0, 0], sizes = [8, 8], strides = [1, 1]} : vector<8x128xf32> to vector<8x8xf32>
    %137 = vector.extract_strided_slice %135 {offsets = [0, 8], sizes = [8, 1], strides = [1, 1]} : vector<8x128xf32> to vector<8x1xf32>
    %138 = arith.negf %137 : vector<8x1xf32>
    %139 = math.exp %138 : vector<8x1xf32>
    %cst_45 = arith.constant 1.000000e+00 : f32
    %140 = vector.broadcast %cst_45 : f32 to vector<8x1xf32>
    %141 = arith.addf %140, %139 : vector<8x1xf32>
    %142 = arith.divf %140, %141 : vector<8x1xf32>
    %143 = vector.extract_strided_slice %135 {offsets = [0, 9], sizes = [8, 1], strides = [1, 1]} : vector<8x128xf32> to vector<8x1xf32>
    %cst_46 = arith.constant dense<0xFF800000> : vector<8xf32>
    %144 = vector.multi_reduction <maximumf>, %136, %cst_46 [1] : vector<8x8xf32> to vector<8xf32>
    %145 = vector.shape_cast %144 : vector<8xf32> to vector<8x1xf32>
    %146 = vector.broadcast %145 : vector<8x1xf32> to vector<8x8xf32>
    %147 = arith.subf %136, %146 : vector<8x8xf32>
    %148 = math.exp %147 : vector<8x8xf32>
    %cst_47 = arith.constant dense<0.000000e+00> : vector<8xf32>
    %149 = vector.multi_reduction <add>, %148, %cst_47 [1] : vector<8x8xf32> to vector<8xf32>
    %150 = vector.shape_cast %149 : vector<8xf32> to vector<8x1xf32>
    %151 = tpu.reciprocal %150 {approx = true} : vector<8x1xf32> -> vector<8x1xf32>
    %152 = vector.broadcast %151 : vector<8x1xf32> to vector<8x8xf32>
    %153 = arith.mulf %148, %152 : vector<8x8xf32>
    %cst_48 = arith.constant 0.000000e+00 : f32
    %154 = vector.broadcast %cst_48 : f32 to vector<8x86xf32>
    %155 = tpu.concatenate %142, %143, %78, %76, %126, %124, %153, %154 in 1 : vector<8x1xf32>, vector<8x1xf32>, vector<8x8xf32>, vector<8x8xf32>, vector<8x8xf32>, vector<8x8xf32>, vector<8x8xf32>, vector<8x86xf32> -> vector<8x128xf32>
    %c0_49 = arith.constant 0 : index
    %c0_50 = arith.constant 0 : index
    %c0_51 = arith.constant 0 : index
    %156 = vector.load %arg6[%c0_49, %c0_50, %c0_51] : memref<1x8x128xf32, #tpu.memory_space<vmem>>, vector<1x8x128xf32>
    %157 = vector.shape_cast %156 : vector<1x8x128xf32> to vector<8x128xf32>
    %158 = vector.shape_cast %155 : vector<8x128xf32> to vector<1x8x128xf32>
    tpu.vector_store %arg6[%c0_49, %c0_50, %c0_51], %158 {strides = array<i32>} : memref<1x8x128xf32, #tpu.memory_space<vmem>>, vector<1x8x128xf32>,
    return
  }
  func.func @transform_0(%arg0: i32, %arg1: i32) -> (i32, i32, i32) {
    %c0_i32 = arith.constant 0 : i32
    %c0_i32_0 = arith.constant 0 : i32
    return %arg1, %arg0, %c0_i32 : i32, i32, i32
  }
  func.func @transform_1(%arg0: i32, %arg1: i32) -> (i32, i32) {
    %c0_i32 = arith.constant 0 : i32
    %c0_i32_0 = arith.constant 0 : i32
    return %arg0, %c0_i32 : i32, i32
  }
  func.func @transform_2(%arg0: i32, %arg1: i32) -> (i32, i32) {
    %c0_i32 = arith.constant 0 : i32
    %c0_i32_0 = arith.constant 0 : i32
    %c0_i32_1 = arith.constant 0 : i32
    return %c0_i32, %c0_i32_0 : i32, i32
  }
  func.func @transform_3(%arg0: i32, %arg1: i32) -> (i32, i32) {
    %c0_i32 = arith.constant 0 : i32
    %c0_i32_0 = arith.constant 0 : i32
    %c0_i32_1 = arith.constant 0 : i32
    return %c0_i32, %c0_i32_0 : i32, i32
  }
  func.func @transform_4(%arg0: i32, %arg1: i32) -> (i32, i32, i32) {
    %c0_i32 = arith.constant 0 : i32
    %c0_i32_0 = arith.constant 0 : i32
    return %arg1, %arg0, %c0_i32 : i32, i32, i32
  }
}

</mosaic_0001>

<llo_original>
// kernel: aria_forward_seq.1
$region0: #{aria_forward_seq.1}
  #allocation0 [shape = 'u32[]', space=smem, size = 0x4, offset = 0x4, fixed_abs, tag = 'smem constant byte address 0x4 - core index']
  #allocation1 [shape = 'u32[144,128]{1,0:T(1,128)}', space=vmem, size = 0x12000, scoped, tag = 'internal scratch']
  #allocation2 [shape = 'f32[8,32]{1,0:T(8,128)}', space=vmem, size = 0x1000, scoped, tag = 'scratch operand']
  %s0 = inlined_call_operand.vmem [shape: f32[6,8,16], index: 0, kind: input, shape index: {}]
  %s1 = inlined_call_operand.vmem [shape: f32[8,32], index: 1, kind: input, shape index: {}]
  %s2 = inlined_call_operand.vmem [shape: bf16[176,128], index: 2, kind: input, shape index: {}]
  %s3 = inlined_call_operand.vmem [shape: f32[8,128], index: 3, kind: input, shape index: {}]
  %s4 = inlined_call_operand.vmem [shape: f32[6,8,128], index: 4, kind: output, shape index: {}]
  %s5 = sld [smem:[#allocation0]]
  $region53: #{aria_forward_seq.1} parent=0
    _
  %s7 = ssub.s32 1, %s5
  %s8 = scalar_select 0, %s7, %s5
  loop: start=0, step=1, limit=8
  $region2: #{aria_forward_seq.1} parent=0 // loop_pre_header
    _
  $region3: #{aria_forward_seq.1} parent=0 // loop_header
    %s10 = sphi 0, %s14
    %p11 = scmp.ge.s32.totalorder %s10, 8
    %s17 = sphi 0, %s29
    %s18 = sphi 0, %s25
    %s19 = sphi 0, %s17
    %s20 = sphi 0, %s18
    %s21 = sphi 0, %s19
    %s22 = sphi 0, %s20
    %s34 = sphi 0, %s36
    %s37 = sphi 0, %s34
    %s38 = sphi 0, %s37
    %s54 = sphi 0, %s38
    %s60 = sphi 0, %s62
    %s63 = sphi 0, %s60
    %s64 = sphi 0, %s63
    %s80 = sphi 0, %s64
    %s84 = sphi 0, %s84
    %s86 = sphi 0, %s84
    %s87 = sphi 0, %s86
    %s101 = sphi 0, %s87
    %s105 = sphi 0, %s105
    %s107 = sphi 0, %s105
    %s108 = sphi 0, %s107
    %s122 = sphi 0, %s108
    %s130 = sphi 0, %s132
    %s133 = sphi 0, %s130
    %s134 = sphi 0, %s133
    %s150 = sphi 0, %s134
  $region4: #{aria_forward_seq.1} parent=0 // loop_header_branch
    %13 = sbr.rel (%p11) target = $region8
  $region5: #{aria_forward_seq.1} parent=0 // loop_body
    %s15 = ssub.s32 %s10, 1
    %s16 = ssub.s32 %s10, 2
    %s23 = sadd.s32 1, %s18
    %p24 = scmp.ge.s32.totalorder %s23, 6
    %s25 = scalar_select %p24, 0, %s23
    %s26 = sadd.s32 1, %s17
    %s27 = scalar_select %p24, %s26, %s17
    %p28 = scmp.ge.s32.totalorder %s27, 1
    %s29 = scalar_select %p28, 0, %s27
    %s30 = ssub.s32 %s18, %s25
    %s31 = ssub.s32 %s17, %s29
    %s32 = sor.u32 %s30, %s31
    %p33 = scmp.eq.s32.totalorder %s32, 0
    %s35 = sadd.s32 %s34, 1
    %s36 = scalar_select %p33, %s34, %s35
    %p39 = pneg %p33
    %p40 = scmp.eq.s32.totalorder %s10, 5
    %p41 = por %p39, %p40
    %p42 = scmp.ne.s32.totalorder %s34, %s37
    %p43 = scmp.eq.s32.totalorder %s10, 0
    %p44 = por %p42, %p43
    %p45 = scmp.ne.s32.totalorder %s34, %s37
    %p46 = scmp.eq.s32.totalorder %s15, 5
    %p47 = por %p45, %p46
    %p48 = scmp.ne.s32.totalorder %s37, %s38
    %p49 = scmp.eq.s32.totalorder %s15, 0
    %p50 = por %p48, %p49
    %p51 = scmp.ne.s32.totalorder %s37, %s38
    %p52 = scmp.eq.s32.totalorder %s16, 5
    %p53 = por %p51, %p52
    %p55 = scmp.ne.s32.totalorder %s38, %s54
    %p56 = scmp.eq.s32.totalorder %s16, 0
    %p57 = por %p55, %p56
    %s58 = ssub.s32 %s17, %s29
    %p59 = scmp.eq.s32.totalorder %s58, 0
    %s61 = sadd.s32 %s60, 1
    %s62 = scalar_select %p59, %s60, %s61
    %p65 = pneg %p59
    %p66 = scmp.eq.s32.totalorder %s10, 5
    %p67 = por %p65, %p66
    %p68 = scmp.ne.s32.totalorder %s60, %s63
    %p69 = scmp.eq.s32.totalorder %s10, 0
    %p70 = por %p68, %p69
    %p71 = scmp.ne.s32.totalorder %s60, %s63
    %p72 = scmp.eq.s32.totalorder %s15, 5
    %p73 = por %p71, %p72
    %p74 = scmp.ne.s32.totalorder %s63, %s64
    %p75 = scmp.eq.s32.totalorder %s15, 0
    %p76 = por %p74, %p75
    %p77 = scmp.ne.s32.totalorder %s63, %s64
    %p78 = scmp.eq.s32.totalorder %s16, 5
    %p79 = por %p77, %p78
    %p81 = scmp.ne.s32.totalorder %s64, %s80
    %p82 = scmp.eq.s32.totalorder %s16, 0
    %p83 = por %p81, %p82
    %s85 = sadd.s32 %s84, 1
    %p88 = scmp.eq.s32.totalorder %s10, 5
    %p89 = scmp.ne.s32.totalorder %s84, %s86
    %p90 = scmp.eq.s32.totalorder %s10, 0
    %p91 = por %p89, %p90
    %p92 = scmp.ne.s32.totalorder %s84, %s86
    %p93 = scmp.eq.s32.totalorder %s15, 5
    %p94 = por %p92, %p93
    %p95 = scmp.ne.s32.totalorder %s86, %s87
    %p96 = scmp.eq.s32.totalorder %s15, 0
    %p97 = por %p95, %p96
    %p98 = scmp.ne.s32.totalorder %s86, %s87
    %p99 = scmp.eq.s32.totalorder %s16, 5
    %p100 = por %p98, %p99
    %p102 = scmp.ne.s32.totalorder %s87, %s101
    %p103 = scmp.eq.s32.totalorder %s16, 0
    %p104 = por %p102, %p103
    %s106 = sadd.s32 %s105, 1
    %p109 = scmp.eq.s32.totalorder %s10, 5
    %p110 = scmp.ne.s32.totalorder %s105, %s107
    %p111 = scmp.eq.s32.totalorder %s10, 0
    %p112 = por %p110, %p111
    %p113 = scmp.ne.s32.totalorder %s105, %s107
    %p114 = scmp.eq.s32.totalorder %s15, 5
    %p115 = por %p113, %p114
    %p116 = scmp.ne.s32.totalorder %s107, %s108
    %p117 = scmp.eq.s32.totalorder %s15, 0
    %p118 = por %p116, %p117
    %p119 = scmp.ne.s32.totalorder %s107, %s108
    %p120 = scmp.eq.s32.totalorder %s16, 5
    %p121 = por %p119, %p120
    %p123 = scmp.ne.s32.totalorder %s108, %s122
    %p124 = scmp.eq.s32.totalorder %s16, 0
    %p125 = por %p123, %p124
    %s126 = ssub.s32 %s18, %s25
    %s127 = ssub.s32 %s17, %s29
    %s128 = sor.u32 %s126, %s127
    %p129 = scmp.eq.s32.totalorder %s128, 0
    %s131 = sadd.s32 %s130, 1
    %s132 = scalar_select %p129, %s130, %s131
    %p135 = pneg %p129
    %p136 = scmp.eq.s32.totalorder %s10, 5
    %p137 = por %p135, %p136
    %p138 = scmp.ne.s32.totalorder %s130, %s133
    %p139 = scmp.eq.s32.totalorder %s10, 0
    %p140 = por %p138, %p139
    %p141 = scmp.ne.s32.totalorder %s130, %s133
    %p142 = scmp.eq.s32.totalorder %s15, 5
    %p143 = por %p141, %p142
    %p144 = scmp.ne.s32.totalorder %s133, %s134
    %p145 = scmp.eq.s32.totalorder %s15, 0
    %p146 = por %p144, %p145
    %p147 = scmp.ne.s32.totalorder %s133, %s134
    %p148 = scmp.eq.s32.totalorder %s16, 5
    %p149 = por %p147, %p148
    %p151 = scmp.ne.s32.totalorder %s134, %s150
    %p152 = scmp.eq.s32.totalorder %s16, 0
    %p153 = por %p151, %p152
    %p154 = scmp.le.s32.totalorder 1, %s10
    %p155 = scmp.lt.s32.totalorder %s10, 7
    %p156 = pnand %p154, %p155
    %p157 = pneg %p156
    // Predicated region
    $region9: #{aria_forward_seq.1} parent=5 // pred_check
      _
    $region10: #{aria_forward_seq.1} parent=5 // pred_check_branch
      %159 = sbr.rel (%p156) target = $region12
    $region11: #{aria_forward_seq.1} parent=5 // pred_region
      %s160 = ssub.s32 %s10, 1
      // Predicated region
      $region13: #{aria_forward_seq.1} parent=11 // pred_check
        %p161 = pneg %p76
      $region14: #{aria_forward_seq.1} parent=11 // pred_check_branch
        %163 = sbr.rel (%p161) target = $region16
      $region15: #{aria_forward_seq.1} parent=11 // pred_region
        %p164 = scmp.lt.s32.totalorder %s19, 0
        %s165 = scalar_select %p164, %s19, 0
        %s166 = smul.addr %s165, 8
        %s167 = scalar_lea.vmem %s1, %s166
      $region16: #{aria_forward_seq.1} parent=11 // pred_fallthru
        _
      // Predicated region
      $region17: #{aria_forward_seq.1} parent=11 // pred_check
        %p168 = pneg %p97
      $region18: #{aria_forward_seq.1} parent=11 // pred_check_branch
        %170 = sbr.rel (%p168) target = $region20
      $region19: #{aria_forward_seq.1} parent=11 // pred_region
        _
      $region20: #{aria_forward_seq.1} parent=11 // pred_fallthru
        _
      // Predicated region
      $region21: #{aria_forward_seq.1} parent=11 // pred_check
        %p171 = pneg %p118
      $region22: #{aria_forward_seq.1} parent=11 // pred_check_branch
        %173 = sbr.rel (%p171) target = $region24
      $region23: #{aria_forward_seq.1} parent=11 // pred_region
        _
      $region24: #{aria_forward_seq.1} parent=11 // pred_fallthru
        _
    $region12: #{aria_forward_seq.1} parent=5 // pred_fallthru
      _
    %p174 = scmp.lt.s32.totalorder %s10, 6
    // Predicated region
    $region25: #{aria_forward_seq.1} parent=5 // pred_check
      %p175 = pneg %p174
    $region26: #{aria_forward_seq.1} parent=5 // pred_check_branch
      %177 = sbr.rel (%p175) target = $region28
    $region27: #{aria_forward_seq.1} parent=5 // pred_region
      // Predicated region
      $region29: #{aria_forward_seq.1} parent=27 // pred_check
        %p178 = pneg %p44
      $region30: #{aria_forward_seq.1} parent=27 // pred_check_branch
        %180 = sbr.rel (%p178) target = $region32
      $region31: #{aria_forward_seq.1} parent=27 // pred_region
        %p181 = scmp.lt.s32.totalorder %s18, 5
        %s182 = scalar_select %p181, %s18, 5
        %p183 = scmp.lt.s32.totalorder %s17, 0
        %s184 = scalar_select %p183, %s17, 0
        %s185 = sadd.s32 %s184, %s182
        %s186 = smul.addr %s185, 8
        %s187 = scalar_lea.vmem %s0, %s186
      $region32: #{aria_forward_seq.1} parent=27 // pred_fallthru
        _
    $region28: #{aria_forward_seq.1} parent=5 // pred_fallthru
      _
    %p188 = scmp.le.s32.totalorder 1, %s10
    %p189 = scmp.lt.s32.totalorder %s10, 7
    %p190 = pnand %p188, %p189
    %p191 = pneg %p190
    // Predicated region
    $region33: #{aria_forward_seq.1} parent=5 // pred_check
      _
    $region34: #{aria_forward_seq.1} parent=5 // pred_check_branch
      %193 = sbr.rel (%p190) target = $region36
    $region35: #{aria_forward_seq.1} parent=5 // pred_region
      %s194 = ssub.s32 %s10, 1
      %p195 = scmp.lt.s32.totalorder %s20, 5
      %s196 = scalar_select %p195, %s20, 5
      %p197 = scmp.lt.s32.totalorder %s19, 0
      %s198 = scalar_select %p197, %s19, 0
      %s199 = sadd.s32 %s198, %s196
      %s200 = smul.addr %s199, 8
      %s201 = scalar_lea.vmem %s0, %s200
      %p202 = pneg %p50
      %p203 = pneg %p47
      %p204 = scmp.lt.s32.totalorder %s19, 0
      %s205 = scalar_select %p204, %s19, 0
      %s206 = smul.addr %s205, 8
      %s207 = scalar_lea.vmem %s1, %s206
      %p208 = pneg %p76
      %p209 = pneg %p73
      %p210 = pneg %p97
      %p211 = pneg %p94
      %p212 = pneg %p118
      %p213 = pneg %p115
      %p214 = pneg %p146
      %p215 = pneg %p143
      %p216 = scmp.lt.s32.totalorder %s20, 5
      %s217 = scalar_select %p216, %s20, 5
      %p218 = scmp.lt.s32.totalorder %s19, 0
      %s219 = scalar_select %p218, %s19, 0
      %s220 = sadd.s32 %s219, %s217
      %s221 = smul.addr %s220, 8
      %s222 = scalar_lea.vmem %s4, %s221
      %p223 = scmp.lt.s32.totalorder %s20, 5
      %s224 = scalar_select %p223, %s20, 5
      %p225 = scmp.lt.s32.totalorder %s19, 0
      %s226 = scalar_select %p225, %s19, 0
      %s227 = sadd.s32 %s226, %s224
      %s228 = smul.addr %s227, 8
      %s229 = scalar_lea.vmem %s0, %s228
      %p230 = scmp.lt.s32.totalorder %s19, 0
      %s231 = scalar_select %p230, %s19, 0
      %s232 = smul.addr %s231, 8
      %s233 = scalar_lea.vmem %s1, %s232
      %p234 = scmp.lt.s32.totalorder %s20, 5
      %s235 = scalar_select %p234, %s20, 5
      %p236 = scmp.lt.s32.totalorder %s19, 0
      %s237 = scalar_select %p236, %s19, 0
      %s238 = sadd.s32 %s237, %s235
      %s239 = smul.addr %s238, 8
      %s240 = scalar_lea.vmem %s4, %s239
      %p242 = scmp.eq.s32.totalorder %s20, 0
      // Predicated region
      $region37: #{aria_forward_seq.1} parent=35 // pred_check
        %p243 = pneg %p242
      $region38: #{aria_forward_seq.1} parent=35 // pred_check_branch
        %245 = sbr.rel (%p243) target = $region40
      $region39: #{aria_forward_seq.1} parent=35 // pred_region
        %v246 = vld [vmem:[%s233] sm:$0xff]
        %vm247 = vcmask 261120
        %248 = vst.msk [vmem:[#allocation2] sm:$0xff] %vm247, %v246
      $region40: #{aria_forward_seq.1} parent=35 // pred_fallthru
        _
      %v249 = vld [vmem:[%s229] sm:$0xff]
      %v250 = vld [vmem:[#allocation2] sm:$0xff]
      %v251 = vld [vmem:[%s2] sm:$0xf]
      %v252 = vld [vmem:[%s2 + $0x4] sm:$0xf]
      %v253 = vpack.c.bf16 %v249, %v249
      %v254 = vld [vmem:[%s3] sm:$0x1]
      %v255 = vlaneseq
      %v256 = vshrl.u32 %v255, 7
      %v257 = vsub.s32 0, %v256
      %v258 = vrot.slane %v254, %v257
      %v261 = vunpack.c.l.b16 %v251
      %v262 = vunpack.c.l.b16 %v252
      %v263 = vpack.c.b16 %v262, %v261
      %vm265 = vcmask 130048
      %v267 = vsel %vm265, %v253, 0
      %269 = vmatprep.subr.bf16.mxu0 0
      %270 = vmatpush1.bf16.msra.mxu0 %v263
      %271 = vmatprep.subr.bf16.mxu0 0
      %272 = vmatpush1.bf16.msra.mxu0 0
      %273 = vmatprep.subr.bf16.mxu0 0
      %274 = vmatpush1.bf16.msra.mxu0 0
      %275 = vmatprep.subr.bf16.mxu0 0
      %276 = vmatpush1.bf16.msra.mxu0 0
      %277 = vmatprep.subr.bf16.mxu0 0
      %278 = vmatpush1.bf16.msra.mxu0 0
      %279 = vmatprep.subr.bf16.mxu0 0
      %280 = vmatpush1.bf16.msra.mxu0 0
      %281 = vmatprep.subr.bf16.mxu0 0
      %282 = vmatpush1.bf16.msra.mxu0 0
      %283 = vmatprep.subr.bf16.mxu0 0
      %284 = vmatpush1.bf16.msra.mxu0 0
      %285 = vmatprep.subr.bf16.mxu0 0
      %286 = vmatpush1.bf16.msra.mxu0 0
      %287 = vmatprep.subr.bf16.mxu0 0
      %288 = vmatpush1.bf16.msra.mxu0 0
      %289 = vmatprep.subr.bf16.mxu0 0
      %290 = vmatpush1.bf16.msra.mxu0 0
      %291 = vmatprep.subr.bf16.mxu0 0
      %292 = vmatpush1.bf16.msra.mxu0 0
      %293 = vmatprep.subr.bf16.mxu0 0
      %294 = vmatpush1.bf16.msra.mxu0 0
      %295 = vmatprep.subr.bf16.mxu0 0
      %296 = vmatpush1.bf16.msra.mxu0 0
      %297 = vmatprep.subr.bf16.mxu0 0
      %298 = vmatpush1.bf16.msra.mxu0 0
      %299 = vmatprep.subr.bf16.mxu0 0
      %300 = vmatpush1.bf16.msra.mxu0 0
      %301 = vmatprep.mubr.bf16.mxu0 0
      %302 = vmatmul.mubr.bf16.gmra.mrb[0].mxu0 %v267
      %v303 = vpop.f32.mrb[0].mxu0
      %v304 = vadd.f32 %v258, %v303
      %v305 = vpop.f32.mrb[0].mxu0
      %v306 = vpop.f32.mrb[0].mxu0
      %v307 = vpop.f32.mrb[0].mxu0
      %308 = vdwg.mxu0
      %v309 = vmax.f32 %v304, 0.0
      %v310 = vld [vmem:[%s2 + $0x8] sm:$0xf]
      %v311 = vld [vmem:[%s2 + $0xc] sm:$0xf]
      %v312 = vpack.c.bf16 %v250, %v250
      %v313 = vld [vmem:[%s3 + $0x1] sm:$0x1]
      %v314 = vlaneseq
      %v315 = vshrl.u32 %v314, 7
      %v316 = vsub.s32 0, %v315
      %v317 = vrot.slane %v313, %v316
      %v320 = vunpack.c.l.b16 %v310
      %v321 = vunpack.c.l.b16 %v311
      %v322 = vpack.c.b16 %v321, %v320
      %v325 = vsel %vm265, %v312, 0
      %327 = vmatprep.subr.bf16.mxu0 0
      %328 = vmatpush1.bf16.msra.mxu0 %v322
      %329 = vmatprep.subr.bf16.mxu0 0
      %330 = vmatpush1.bf16.msra.mxu0 0
      %331 = vmatprep.subr.bf16.mxu0 0
      %332 = vmatpush1.bf16.msra.mxu0 0
      %333 = vmatprep.subr.bf16.mxu0 0
      %334 = vmatpush1.bf16.msra.mxu0 0
      %335 = vmatprep.subr.bf16.mxu0 0
      %336 = vmatpush1.bf16.msra.mxu0 0
      %337 = vmatprep.subr.bf16.mxu0 0
      %338 = vmatpush1.bf16.msra.mxu0 0
      %339 = vmatprep.subr.bf16.mxu0 0
      %340 = vmatpush1.bf16.msra.mxu0 0
      %341 = vmatprep.subr.bf16.mxu0 0
      %342 = vmatpush1.bf16.msra.mxu0 0
      %343 = vmatprep.subr.bf16.mxu0 0
      %344 = vmatpush1.bf16.msra.mxu0 0
      %345 = vmatprep.subr.bf16.mxu0 0
      %346 = vmatpush1.bf16.msra.mxu0 0
      %347 = vmatprep.subr.bf16.mxu0 0
      %348 = vmatpush1.bf16.msra.mxu0 0
      %349 = vmatprep.subr.bf16.mxu0 0
      %350 = vmatpush1.bf16.msra.mxu0 0
      %351 = vmatprep.subr.bf16.mxu0 0
      %352 = vmatpush1.bf16.msra.mxu0 0
      %353 = vmatprep.subr.bf16.mxu0 0
      %354 = vmatpush1.bf16.msra.mxu0 0
      %355 = vmatprep.subr.bf16.mxu0 0
      %356 = vmatpush1.bf16.msra.mxu0 0
      %357 = vmatprep.subr.bf16.mxu0 0
      %358 = vmatpush1.bf16.msra.mxu0 0
      %359 = vmatprep.mubr.bf16.mxu0 0
      %360 = vmatmul.mubr.bf16.gmra.mrb[0].mxu0 %v325
      %v361 = vpop.f32.mrb[0].mxu0
      %v362 = vadd.f32 %v317, %v361
      %v363 = vpop.f32.mrb[0].mxu0
      %v364 = vpop.f32.mrb[0].mxu0
      %v365 = vpop.f32.mrb[0].mxu0
      %366 = vdwg.mxu0
      %v367 = vld [vmem:[%s2 + $0x10] sm:$0xf]
      %v368 = vld [vmem:[%s2 + $0x14] sm:$0xf]
      %v369 = vld [vmem:[%s2 + $0x18] sm:$0xf]
      %v370 = vld [vmem:[%s2 + $0x1c] sm:$0xf]
      %v371 = vpack.c.bf16 %v309, %v309
      %v372 = vld [vmem:[%s3 + $0x2] sm:$0x1]
      %v373 = vlaneseq
      %v374 = vshrl.u32 %v373, 7
      %v375 = vsub.s32 0, %v374
      %v376 = vrot.slane %v372, %v375
      %v381 = vunpack.c.l.b16 %v367
      %v382 = vunpack.c.l.b16 %v368
      %v383 = vunpack.c.l.b16 %v369
      %v384 = vunpack.c.l.b16 %v370
      %v385 = vpack.c.b16 %v382, %v381
      %v386 = vpack.c.b16 %v384, %v383
      %vm389 = vcmask 261120
      %v391 = vsel %vm389, %v371, 0
      %393 = vmatprep.subr.bf16.mxu0 0
      %394 = vmatpush1.bf16.msra.mxu0 %v385
      %395 = vmatprep.subr.bf16.mxu0 0
      %396 = vmatpush1.bf16.msra.mxu0 %v386
      %397 = vmatprep.subr.bf16.mxu0 0
      %398 = vmatpush1.bf16.msra.mxu0 0
      %399 = vmatprep.subr.bf16.mxu0 0
      %400 = vmatpush1.bf16.msra.mxu0 0
      %401 = vmatprep.subr.bf16.mxu0 0
      %402 = vmatpush1.bf16.msra.mxu0 0
      %403 = vmatprep.subr.bf16.mxu0 0
      %404 = vmatpush1.bf16.msra.mxu0 0
      %405 = vmatprep.subr.bf16.mxu0 0
      %406 = vmatpush1.bf16.msra.mxu0 0
      %407 = vmatprep.subr.bf16.mxu0 0
      %408 = vmatpush1.bf16.msra.mxu0 0
      %409 = vmatprep.subr.bf16.mxu0 0
      %410 = vmatpush1.bf16.msra.mxu0 0
      %411 = vmatprep.subr.bf16.mxu0 0
      %412 = vmatpush1.bf16.msra.mxu0 0
      %413 = vmatprep.subr.bf16.mxu0 0
      %414 = vmatpush1.bf16.msra.mxu0 0
      %415 = vmatprep.subr.bf16.mxu0 0
      %416 = vmatpush1.bf16.msra.mxu0 0
      %417 = vmatprep.subr.bf16.mxu0 0
      %418 = vmatpush1.bf16.msra.mxu0 0
      %419 = vmatprep.subr.bf16.mxu0 0
      %420 = vmatpush1.bf16.msra.mxu0 0
      %421 = vmatprep.subr.bf16.mxu0 0
      %422 = vmatpush1.bf16.msra.mxu0 0
      %423 = vmatprep.subr.bf16.mxu0 0
      %424 = vmatpush1.bf16.msra.mxu0 0
      %425 = vmatprep.mubr.bf16.mxu0 0
      %426 = vmatmul.mubr.bf16.gmra.mrb[0].mxu0 %v391
      %v427 = vpop.f32.mrb[0].mxu0
      %v428 = vadd.f32 %v376, %v427
      %v429 = vpop.f32.mrb[0].mxu0
      %v430 = vpop.f32.mrb[0].mxu0
      %v431 = vpop.f32.mrb[0].mxu0
      %432 = vdwg.mxu0
      %v433 = vmax.f32 %v428, 0.0
      %v434 = vld [vmem:[%s2 + $0x20] sm:$0xf]
      %v435 = vld [vmem:[%s2 + $0x24] sm:$0xf]
      %v436 = vpack.c.bf16 %v433, %v433
      %438 = vrot.lane.b32.xlu0 %v436, 96
      %v439 = vpop.permute.xlu0 %438
      %v442 = vunpack.c.l.b16 %v434
      %v443 = vunpack.c.l.b16 %v435
      %v444 = vpack.c.b16 %v443, %v442
      %v447 = vsel %vm265, %v439, 0
      %449 = vmatprep.subr.bf16.mxu0 0
      %450 = vmatpush1.bf16.msra.mxu0 %v444
      %451 = vmatprep.subr.bf16.mxu0 0
      %452 = vmatpush1.bf16.msra.mxu0 0
      %453 = vmatprep.subr.bf16.mxu0 0
      %454 = vmatpush1.bf16.msra.mxu0 0
      %455 = vmatprep.subr.bf16.mxu0 0
      %456 = vmatpush1.bf16.msra.mxu0 0
      %457 = vmatprep.subr.bf16.mxu0 0
      %458 = vmatpush1.bf16.msra.mxu0 0
      %459 = vmatprep.subr.bf16.mxu0 0
      %460 = vmatpush1.bf16.msra.mxu0 0
      %461 = vmatprep.subr.bf16.mxu0 0
      %462 = vmatpush1.bf16.msra.mxu0 0
      %463 = vmatprep.subr.bf16.mxu0 0
      %464 = vmatpush1.bf16.msra.mxu0 0
      %465 = vmatprep.subr.bf16.mxu0 0
      %466 = vmatpush1.bf16.msra.mxu0 0
      %467 = vmatprep.subr.bf16.mxu0 0
      %468 = vmatpush1.bf16.msra.mxu0 0
      %469 = vmatprep.subr.bf16.mxu0 0
      %470 = vmatpush1.bf16.msra.mxu0 0
      %471 = vmatprep.subr.bf16.mxu0 0
      %472 = vmatpush1.bf16.msra.mxu0 0
      %473 = vmatprep.subr.bf16.mxu0 0
      %474 = vmatpush1.bf16.msra.mxu0 0
      %475 = vmatprep.subr.bf16.mxu0 0
      %476 = vmatpush1.bf16.msra.mxu0 0
      %477 = vmatprep.subr.bf16.mxu0 0
      %478 = vmatpush1.bf16.msra.mxu0 0
      %479 = vmatprep.subr.bf16.mxu0 0
      %480 = vmatpush1.bf16.msra.mxu0 0
      %481 = vmatprep.mubr.bf16.mxu0 0
      %482 = vmatmul.mubr.bf16.gmra.mrb[0].mxu0 %v447
      %v483 = vpop.f32.mrb[0].mxu0
      %v484 = vadd.f32 0.0, %v483
      %v485 = vpop.f32.mrb[0].mxu0
      %v486 = vpop.f32.mrb[0].mxu0
      %v487 = vpop.f32.mrb[0].mxu0
      %488 = vdwg.mxu0
      %v489 = vadd.f32 %v484, %v428
      %v490 = vmax.f32 %v489, 0.0
      %v491 = vld [vmem:[%s2 + $0x28] sm:$0xf]
      %v492 = vld [vmem:[%s2 + $0x2c] sm:$0xf]
      %v493 = vld [vmem:[%s2 + $0x30] sm:$0xf]
      %v494 = vld [vmem:[%s2 + $0x34] sm:$0xf]
      %v495 = vpack.c.bf16 %v490, %v490
      %v496 = vld [vmem:[%s3 + $0x3] sm:$0x1]
      %v497 = vlaneseq
      %v498 = vshrl.u32 %v497, 7
      %v499 = vsub.s32 0, %v498
      %v500 = vrot.slane %v496, %v499
      %v505 = vunpack.c.l.b16 %v491
      %v506 = vunpack.c.l.b16 %v492
      %v507 = vunpack.c.l.b16 %v493
      %v508 = vunpack.c.l.b16 %v494
      %v509 = vpack.c.b16 %v506, %v505
      %v510 = vpack.c.b16 %v508, %v507
      %v514 = vsel %vm389, %v495, 0
      %516 = vmatprep.subr.bf16.mxu0 0
      %517 = vmatpush1.bf16.msra.mxu0 %v509
      %518 = vmatprep.subr.bf16.mxu0 0
      %519 = vmatpush1.bf16.msra.mxu0 %v510
      %520 = vmatprep.subr.bf16.mxu0 0
      %521 = vmatpush1.bf16.msra.mxu0 0
      %522 = vmatprep.subr.bf16.mxu0 0
      %523 = vmatpush1.bf16.msra.mxu0 0
      %524 = vmatprep.subr.bf16.mxu0 0
      %525 = vmatpush1.bf16.msra.mxu0 0
      %526 = vmatprep.subr.bf16.mxu0 0
      %527 = vmatpush1.bf16.msra.mxu0 0
      %528 = vmatprep.subr.bf16.mxu0 0
      %529 = vmatpush1.bf16.msra.mxu0 0
      %530 = vmatprep.subr.bf16.mxu0 0
      %531 = vmatpush1.bf16.msra.mxu0 0
      %532 = vmatprep.subr.bf16.mxu0 0
      %533 = vmatpush1.bf16.msra.mxu0 0
      %534 = vmatprep.subr.bf16.mxu0 0
      %535 = vmatpush1.bf16.msra.mxu0 0
      %536 = vmatprep.subr.bf16.mxu0 0
      %537 = vmatpush1.bf16.msra.mxu0 0
      %538 = vmatprep.subr.bf16.mxu0 0
      %539 = vmatpush1.bf16.msra.mxu0 0
      %540 = vmatprep.subr.bf16.mxu0 0
      %541 = vmatpush1.bf16.msra.mxu0 0
      %542 = vmatprep.subr.bf16.mxu0 0
      %543 = vmatpush1.bf16.msra.mxu0 0
      %544 = vmatprep.subr.bf16.mxu0 0
      %545 = vmatpush1.bf16.msra.mxu0 0
      %546 = vmatprep.subr.bf16.mxu0 0
      %547 = vmatpush1.bf16.msra.mxu0 0
      %548 = vmatprep.mubr.bf16.mxu0 0
      %549 = vmatmul.mubr.bf16.gmra.mrb[0].mxu0 %v514
      %v550 = vpop.f32.mrb[0].mxu0
      %v551 = vadd.f32 %v500, %v550
      %v552 = vpop.f32.mrb[0].mxu0
      %v553 = vpop.f32.mrb[0].mxu0
      %v554 = vpop.f32.mrb[0].mxu0
      %555 = vdwg.mxu0
      %v556 = vadd.f32 %v551, %v362
      %v557 = vmax.f32 %v551, 0.0
      %v558 = vxor.u32 %v556, 2147483648
      %v559 = vmul.f32 %v558, 1.442695
      %v560 = vpow.pop %v559
      %v561 = vadd.f32 %v560, 1.0
      %v562 = vrcp.pop %v561
      %v563 = vmul.f32 1.0, %v562
      %v564 = vtanh.pop %v556
      %566 = vrot.lane.b32.xlu0 %v250, 120
      %v567 = vpop.permute.xlu0 %566
      %v569 = vmul.f32 %v563, %v567
      %571 = vrot.lane.b32.xlu0 %v564, 112
      %v572 = vpop.permute.xlu0 %571
      %v574 = vmul.f32 %v563, %v572
      %576 = vrot.lane.b32.xlu0 %v574, 8
      %v577 = vpop.permute.xlu0 %576
      %v579 = vadd.f32 %v569, %v577
      %v580 = vtanh.pop %v579
      %582 = vrot.lane.b32.xlu0 %v580, 16
      %v583 = vpop.permute.xlu0 %582
      %v585 = vmul.f32 %v563, %v583
      %v586 = vld [vmem:[%s2 + $0x38] sm:$0xf]
      %v587 = vld [vmem:[%s2 + $0x3c] sm:$0xf]
      %v588 = vpack.c.bf16 %v557, %v557
      %v589 = vld [vmem:[%s3 + $0x4] sm:$0x1]
      %v590 = vlaneseq
      %v591 = vshrl.u32 %v590, 7
      %v592 = vsub.s32 0, %v591
      %v593 = vrot.slane %v589, %v592
      %595 = vrot.lane.b32.xlu0 %v588, 96
      %v596 = vpop.permute.xlu0 %595
      %v599 = vunpack.c.l.b16 %v586
      %v600 = vunpack.c.l.b16 %v587
      %v601 = vpack.c.b16 %v600, %v599
      %v604 = vsel %vm265, %v596, 0
      %606 = vmatprep.subr.bf16.mxu0 0
      %607 = vmatpush1.bf16.msra.mxu0 %v601
      %608 = vmatprep.subr.bf16.mxu0 0
      %609 = vmatpush1.bf16.msra.mxu0 0
      %610 = vmatprep.subr.bf16.mxu0 0
      %611 = vmatpush1.bf16.msra.mxu0 0
      %612 = vmatprep.subr.bf16.mxu0 0
      %613 = vmatpush1.bf16.msra.mxu0 0
      %614 = vmatprep.subr.bf16.mxu0 0
      %615 = vmatpush1.bf16.msra.mxu0 0
      %616 = vmatprep.subr.bf16.mxu0 0
      %617 = vmatpush1.bf16.msra.mxu0 0
      %618 = vmatprep.subr.bf16.mxu0 0
      %619 = vmatpush1.bf16.msra.mxu0 0
      %620 = vmatprep.subr.bf16.mxu0 0
      %621 = vmatpush1.bf16.msra.mxu0 0
      %622 = vmatprep.subr.bf16.mxu0 0
      %623 = vmatpush1.bf16.msra.mxu0 0
      %624 = vmatprep.subr.bf16.mxu0 0
      %625 = vmatpush1.bf16.msra.mxu0 0
      %626 = vmatprep.subr.bf16.mxu0 0
      %627 = vmatpush1.bf16.msra.mxu0 0
      %628 = vmatprep.subr.bf16.mxu0 0
      %629 = vmatpush1.bf16.msra.mxu0 0
      %630 = vmatprep.subr.bf16.mxu0 0
      %631 = vmatpush1.bf16.msra.mxu0 0
      %632 = vmatprep.subr.bf16.mxu0 0
      %633 = vmatpush1.bf16.msra.mxu0 0
      %634 = vmatprep.subr.bf16.mxu0 0
      %635 = vmatpush1.bf16.msra.mxu0 0
      %636 = vmatprep.subr.bf16.mxu0 0
      %637 = vmatpush1.bf16.msra.mxu0 0
      %638 = vmatprep.mubr.bf16.mxu0 0
      %639 = vmatmul.mubr.bf16.gmra.mrb[0].mxu0 %v604
      %v640 = vpop.f32.mrb[0].mxu0
      %v641 = vadd.f32 %v593, %v640
      %v642 = vpop.f32.mrb[0].mxu0
      %v643 = vpop.f32.mrb[0].mxu0
      %v644 = vpop.f32.mrb[0].mxu0
      %645 = vdwg.mxu0
      %v646 = vmax.f32 %v641, 0.0
      %v647 = vld [vmem:[%s2 + $0x40] sm:$0xf]
      %v648 = vld [vmem:[%s2 + $0x44] sm:$0xf]
      %v649 = vpack.c.bf16 %v646, %v646
      %v650 = vld [vmem:[%s3 + $0x5] sm:$0x1]
      %v651 = vlaneseq
      %v652 = vshrl.u32 %v651, 7
      %v653 = vsub.s32 0, %v652
      %v654 = vrot.slane %v650, %v653
      %v657 = vunpack.c.l.b16 %v647
      %v658 = vunpack.c.l.b16 %v648
      %v659 = vpack.c.b16 %v658, %v657
      %v662 = vsel %vm265, %v649, 0
      %664 = vmatprep.subr.bf16.mxu0 0
      %665 = vmatpush1.bf16.msra.mxu0 %v659
      %666 = vmatprep.subr.bf16.mxu0 0
      %667 = vmatpush1.bf16.msra.mxu0 0
      %668 = vmatprep.subr.bf16.mxu0 0
      %669 = vmatpush1.bf16.msra.mxu0 0
      %670 = vmatprep.subr.bf16.mxu0 0
      %671 = vmatpush1.bf16.msra.mxu0 0
      %672 = vmatprep.subr.bf16.mxu0 0
      %673 = vmatpush1.bf16.msra.mxu0 0
      %674 = vmatprep.subr.bf16.mxu0 0
      %675 = vmatpush1.bf16.msra.mxu0 0
      %676 = vmatprep.subr.bf16.mxu0 0
      %677 = vmatpush1.bf16.msra.mxu0 0
      %678 = vmatprep.subr.bf16.mxu0 0
      %679 = vmatpush1.bf16.msra.mxu0 0
      %680 = vmatprep.subr.bf16.mxu0 0
      %681 = vmatpush1.bf16.msra.mxu0 0
      %682 = vmatprep.subr.bf16.mxu0 0
      %683 = vmatpush1.bf16.msra.mxu0 0
      %684 = vmatprep.subr.bf16.mxu0 0
      %685 = vmatpush1.bf16.msra.mxu0 0
      %686 = vmatprep.subr.bf16.mxu0 0
      %687 = vmatpush1.bf16.msra.mxu0 0
      %688 = vmatprep.subr.bf16.mxu0 0
      %689 = vmatpush1.bf16.msra.mxu0 0
      %690 = vmatprep.subr.bf16.mxu0 0
      %691 = vmatpush1.bf16.msra.mxu0 0
      %692 = vmatprep.subr.bf16.mxu0 0
      %693 = vmatpush1.bf16.msra.mxu0 0
      %694 = vmatprep.subr.bf16.mxu0 0
      %695 = vmatpush1.bf16.msra.mxu0 0
      %696 = vmatprep.mubr.bf16.mxu0 0
      %697 = vmatmul.mubr.bf16.gmra.mrb[0].mxu0 %v662
      %v698 = vpop.f32.mrb[0].mxu0
      %v699 = vadd.f32 %v654, %v698
      %v700 = vpop.f32.mrb[0].mxu0
      %v701 = vpop.f32.mrb[0].mxu0
      %v702 = vpop.f32.mrb[0].mxu0
      %703 = vdwg.mxu0
      %v704 = vmax.f32 %v699, 0.0
      %v705 = vld [vmem:[%s2 + $0x48] sm:$0xf]
      %v706 = vld [vmem:[%s2 + $0x4c] sm:$0xf]
      %v707 = vpack.c.bf16 %v704, %v704
      %v710 = vunpack.c.l.b16 %v705
      %v711 = vunpack.c.l.b16 %v706
      %v712 = vpack.c.b16 %v711, %v710
      %v715 = vsel %vm265, %v707, 0
      %717 = vmatprep.subr.bf16.mxu0 0
      %718 = vmatpush1.bf16.msra.mxu0 %v712
      %719 = vmatprep.subr.bf16.mxu0 0
      %720 = vmatpush1.bf16.msra.mxu0 0
      %721 = vmatprep.subr.bf16.mxu0 0
      %722 = vmatpush1.bf16.msra.mxu0 0
      %723 = vmatprep.subr.bf16.mxu0 0
      %724 = vmatpush1.bf16.msra.mxu0 0
      %725 = vmatprep.subr.bf16.mxu0 0
      %726 = vmatpush1.bf16.msra.mxu0 0
      %727 = vmatprep.subr.bf16.mxu0 0
      %728 = vmatpush1.bf16.msra.mxu0 0
      %729 = vmatprep.subr.bf16.mxu0 0
      %730 = vmatpush1.bf16.msra.mxu0 0
      %731 = vmatprep.subr.bf16.mxu0 0
      %732 = vmatpush1.bf16.msra.mxu0 0
      %733 = vmatprep.subr.bf16.mxu0 0
      %734 = vmatpush1.bf16.msra.mxu0 0
      %735 = vmatprep.subr.bf16.mxu0 0
      %736 = vmatpush1.bf16.msra.mxu0 0
      %737 = vmatprep.subr.bf16.mxu0 0
      %738 = vmatpush1.bf16.msra.mxu0 0
      %739 = vmatprep.subr.bf16.mxu0 0
      %740 = vmatpush1.bf16.msra.mxu0 0
      %741 = vmatprep.subr.bf16.mxu0 0
      %742 = vmatpush1.bf16.msra.mxu0 0
      %743 = vmatprep.subr.bf16.mxu0 0
      %744 = vmatpush1.bf16.msra.mxu0 0
      %745 = vmatprep.subr.bf16.mxu0 0
      %746 = vmatpush1.bf16.msra.mxu0 0
      %747 = vmatprep.subr.bf16.mxu0 0
      %748 = vmatpush1.bf16.msra.mxu0 0
      %749 = vmatprep.mubr.bf16.mxu0 0
      %750 = vmatmul.mubr.bf16.gmra.mrb[0].mxu0 %v715
      %v751 = vpop.f32.mrb[0].mxu0
      %v752 = vadd.f32 0.0, %v751
      %v753 = vpop.f32.mrb[0].mxu0
      %v754 = vpop.f32.mrb[0].mxu0
      %v755 = vpop.f32.mrb[0].mxu0
      %756 = vdwg.mxu0
      %758 = vrot.lane.b32.xlu0 %v362, 96
      %v759 = vpop.permute.xlu0 %758
      %v761 = vadd.f32 %v752, %v759
      %v762 = vxor.u32 %v761, 2147483648
      %v763 = vmul.f32 %v762, 1.442695
      %v764 = vpow.pop %v763
      %v765 = vadd.f32 %v764, 1.0
      %v766 = vrcp.pop %v765
      %v767 = vmul.f32 1.0, %v766
      %v768 = vtanh.pop %v761
      %769 = vrot.lane.b32.xlu0 %v250, 112
      %v770 = vpop.permute.xlu0 %769
      %v772 = vmul.f32 %v767, %v770
      %774 = vrot.lane.b32.xlu0 %v768, 112
      %v775 = vpop.permute.xlu0 %774
      %v777 = vmul.f32 %v767, %v775
      %779 = vrot.lane.b32.xlu0 %v777, 8
      %v780 = vpop.permute.xlu0 %779
      %v782 = vadd.f32 %v772, %v780
      %v783 = vtanh.pop %v782
      %785 = vrot.lane.b32.xlu0 %v783, 16
      %v786 = vpop.permute.xlu0 %785
      %v788 = vmul.f32 %v767, %v786
      %790 = vrot.lane.b32.xlu0 %v585, 104
      %v791 = vpop.permute.xlu0 %790
      %794 = vrot.lane.b32.xlu0 %v788, 112
      %v795 = vpop.permute.xlu0 %794
      %vm797 = vcmask 64512
      %v798 = vsel %vm797, %v791, %v795
      %800 = vrot.lane.b32.xlu0 %v579, 8
      %v801 = vpop.permute.xlu0 %800
      %804 = vrot.lane.b32.xlu0 %v782, 16
      %v805 = vpop.permute.xlu0 %804
      %v807 = vsel %vm265, %v798, %v801
      %vm808 = vcmask 195584
      %v809 = vsel %vm808, %v807, %v805
      %810 = vst.msk [vmem:[#allocation2] sm:$0xff] %vm389, %v809
      %v811 = vld [vmem:[%s2 + $0x50] sm:$0xf]
      %v812 = vld [vmem:[%s2 + $0x54] sm:$0xf]
      %v813 = vpack.c.bf16 %v798, %v798
      %v814 = vld [vmem:[%s3 + $0x6] sm:$0x1]
      %v815 = vlaneseq
      %v816 = vshrl.u32 %v815, 7
      %v817 = vsub.s32 0, %v816
      %v818 = vrot.slane %v814, %v817
      %v821 = vunpack.c.l.b16 %v811
      %v822 = vunpack.c.l.b16 %v812
      %v823 = vpack.c.b16 %v822, %v821
      %v826 = vsel %vm265, %v813, 0
      %828 = vmatprep.subr.bf16.mxu0 0
      %829 = vmatpush1.bf16.msra.mxu0 %v823
      %830 = vmatprep.subr.bf16.mxu0 0
      %831 = vmatpush1.bf16.msra.mxu0 0
      %832 = vmatprep.subr.bf16.mxu0 0
      %833 = vmatpush1.bf16.msra.mxu0 0
      %834 = vmatprep.subr.bf16.mxu0 0
      %835 = vmatpush1.bf16.msra.mxu0 0
      %836 = vmatprep.subr.bf16.mxu0 0
      %837 = vmatpush1.bf16.msra.mxu0 0
      %838 = vmatprep.subr.bf16.mxu0 0
      %839 = vmatpush1.bf16.msra.mxu0 0
      %840 = vmatprep.subr.bf16.mxu0 0
      %841 = vmatpush1.bf16.msra.mxu0 0
      %842 = vmatprep.subr.bf16.mxu0 0
      %843 = vmatpush1.bf16.msra.mxu0 0
      %844 = vmatprep.subr.bf16.mxu0 0
      %845 = vmatpush1.bf16.msra.mxu0 0
      %846 = vmatprep.subr.bf16.mxu0 0
      %847 = vmatpush1.bf16.msra.mxu0 0
      %848 = vmatprep.subr.bf16.mxu0 0
      %849 = vmatpush1.bf16.msra.mxu0 0
      %850 = vmatprep.subr.bf16.mxu0 0
      %851 = vmatpush1.bf16.msra.mxu0 0
      %852 = vmatprep.subr.bf16.mxu0 0
      %853 = vmatpush1.bf16.msra.mxu0 0
      %854 = vmatprep.subr.bf16.mxu0 0
      %855 = vmatpush1.bf16.msra.mxu0 0
      %856 = vmatprep.subr.bf16.mxu0 0
      %857 = vmatpush1.bf16.msra.mxu0 0
      %858 = vmatprep.subr.bf16.mxu0 0
      %859 = vmatpush1.bf16.msra.mxu0 0
      %860 = vmatprep.mubr.bf16.mxu0 0
      %861 = vmatmul.mubr.bf16.gmra.mrb[0].mxu0 %v826
      %v862 = vpop.f32.mrb[0].mxu0
      %v863 = vadd.f32 %v818, %v862
      %v864 = vpop.f32.mrb[0].mxu0
      %v865 = vpop.f32.mrb[0].mxu0
      %v866 = vpop.f32.mrb[0].mxu0
      %867 = vdwg.mxu0
      %v868 = vxor.u32 %v863, 2147483648
      %v869 = vmul.f32 %v868, 1.442695
      %v870 = vpow.pop %v869
      %v871 = vadd.f32 %v870, 1.0
      %v872 = vrcp.pop %v871
      %v873 = vmul.f32 1.0, %v872
      %v874 = vsel %vm797, %v863, -inf
      %875 = vmax.xlane.f32.xlu0 %v874
      %v876 = vpop.xlane.xlu0 %875
      %v877 = vsub.f32 %v863, %v876
      %v878 = vmul.f32 %v877, 1.442695
      %v879 = vpow.pop %v878
      %v880 = vsel %vm797, %v879, 0.0
      %881 = vadd.xlane.f32.xlu0 %v880
      %v882 = vpop.xlane.xlu0 %881
      %v883 = vrcp.pop %v882
      %v884 = vmul.f32 %v879, %v883
      %886 = vrot.lane.b32.xlu0 %v873, 120
      %v887 = vpop.permute.xlu0 %886
      %890 = vrot.lane.b32.xlu0 %v863, 120
      %v891 = vpop.permute.xlu0 %890
      %893 = vrot.lane.b32.xlu0 %v585, 106
      %v894 = vpop.permute.xlu0 %893
      %896 = vrot.lane.b32.xlu0 %v579, 2
      %v897 = vpop.permute.xlu0 %896
      %899 = vrot.lane.b32.xlu0 %v788, 122
      %v900 = vpop.permute.xlu0 %899
      %902 = vrot.lane.b32.xlu0 %v782, 18
      %v903 = vpop.permute.xlu0 %902
      %906 = vrot.lane.b32.xlu0 %v884, 34
      %v907 = vpop.permute.xlu0 %906
      %vm909 = vcmask 7168
      %v910 = vsel %vm909, %v887, %v891
      %vm911 = vcmask 15360
      %v912 = vsel %vm911, %v910, %v894
      %vm913 = vcmask 80896
      %v914 = vsel %vm913, %v912, %v897
      %vm915 = vcmask 146432
      %v916 = vsel %vm915, %v914, %v900
      %vm917 = vcmask 211968
      %v918 = vsel %vm917, %v916, %v903
      %vm919 = vcmask 277504
      %v920 = vsel %vm919, %v918, %v907
      %vm921 = vcmask 343040
      %v922 = vsel %vm921, %v920, 0.0
      %923 = vst [vmem:[%s240] sm:$0xff] %v922
      %p924 = scmp.lt.s32.totalorder %s20, 5
      %s925 = scalar_select %p924, %s20, 5
      %p926 = scmp.lt.s32.totalorder %s19, 0
      %s927 = scalar_select %p926, %s19, 0
      %s928 = sadd.s32 %s927, %s925
      %s929 = smul.addr %s928, 8
      %s930 = scalar_lea.vmem %s4, %s929
      // Predicated region
      $region41: #{aria_forward_seq.1} parent=35 // pred_check
        %p931 = pneg %p143
      $region42: #{aria_forward_seq.1} parent=35 // pred_check_branch
        %933 = sbr.rel (%p931) target = $region44
      $region43: #{aria_forward_seq.1} parent=35 // pred_region
        _
      $region44: #{aria_forward_seq.1} parent=35 // pred_fallthru
        _
    $region36: #{aria_forward_seq.1} parent=5 // pred_fallthru
      _
    %p934 = scmp.le.s32.totalorder 2, %s10
    // Predicated region
    $region45: #{aria_forward_seq.1} parent=5 // pred_check
      %p935 = pneg %p934
    $region46: #{aria_forward_seq.1} parent=5 // pred_check_branch
      %937 = sbr.rel (%p935) target = $region48
    $region47: #{aria_forward_seq.1} parent=5 // pred_region
      %s938 = ssub.s32 %s10, 2
      // Predicated region
      $region49: #{aria_forward_seq.1} parent=47 // pred_check
        %p939 = pneg %p149
      $region50: #{aria_forward_seq.1} parent=47 // pred_check_branch
        %941 = sbr.rel (%p939) target = $region52
      $region51: #{aria_forward_seq.1} parent=47 // pred_region
        %p942 = scmp.lt.s32.totalorder %s22, 5
        %s943 = scalar_select %p942, %s22, 5
        %p944 = scmp.lt.s32.totalorder %s21, 0
        %s945 = scalar_select %p944, %s21, 0
        %s946 = sadd.s32 %s945, %s943
        %s947 = smul.addr %s946, 8
        %s948 = scalar_lea.vmem %s4, %s947
      $region52: #{aria_forward_seq.1} parent=47 // pred_fallthru
        _
    $region48: #{aria_forward_seq.1} parent=5 // pred_fallthru
      _
  $region6: #{aria_forward_seq.1} parent=0 // loop_footer
    %s14 = sadd.s32 1, %s10
  $region7: #{aria_forward_seq.1} parent=0 // loop_footer_branch
    %9 = sbr.rel target = $region3
  $region8: #{aria_forward_seq.1} parent=0 // loop_exit
    _

</llo_original>
